<compile_context>
chip_gen: v5e
topology: v5e:2x2
jax: 0.10.0
libtpu: 0.0.40
codegen_flags: <defaults>
</compile_context>

<pallas_src>
import math
from functools import partial

import jax
import jax.numpy as jnp
from jax.experimental import pallas as pl
from jax.experimental.pallas import tpu as pltpu


def _round_up(x, m):
    return ((x + m - 1) // m) * m


def mlp_kernel(x_ref,
               w1_ref, b1_ref,
               w2_ref, b2_ref,
               w3_ref, b3_ref,
               w4_ref, b4_ref,
               w5_ref, b5_ref,
               o_ref,
               *, compute_dtype):
    """Fused 5-layer MLP on one batch tile: relu(xW+b) x4 -> xW5+b5."""

    def linear(h, w_ref, b_ref):
        # Dot inputs in the MXU dtype (f32 or bf16); accumulate in f32.
        return jnp.dot(h.astype(compute_dtype), w_ref[...],
                       preferred_element_type=jnp.float32) + b_ref[...]

    h = x_ref[...]
    h = jnp.maximum(linear(h, w1_ref, b1_ref), 0.0)   # ReLU stays f32 (v5e-safe)
    h = jnp.maximum(linear(h, w2_ref, b2_ref), 0.0)
    h = jnp.maximum(linear(h, w3_ref, b3_ref), 0.0)
    h = jnp.maximum(linear(h, w4_ref, b4_ref), 0.0)
    o_ref[...] = linear(h, w5_ref, b5_ref)


def prepare_params(params, weight_dtype=jnp.float32):
    """One-time weight cast (biases stay f32). Do this at model init, not per call."""
    return [(w.astype(weight_dtype), b.astype(jnp.float32)) for w, b in params]


@partial(jax.jit, static_argnames=("weight_dtype", "tb"))
def mlp_forward(x, params, *, weight_dtype=jnp.float32, tb=4096):
    """x: [B, in_dim] f32; params: list of (W[in,out], b[1,out])."""
    B, in_dim = x.shape
    out_dim = int(params[-1][0].shape[1])

    # Divisor-aware batch tile: as large as possible (amortize per-step
    # overhead / keep MXU fed) while keeping batch padding waste < 8 rows.
    n_tiles = max(1, -(-B // tb))
    TB = _round_up(-(-B // n_tiles), 8)
    B_pad = n_tiles * TB

    # Ship activations in the MXU dtype (halves the dominant input DMA on the
    # bf16 path). Only the batch rows are padded, and only when needed.
    act_dtype = weight_dtype
    xk = x.astype(act_dtype)
    if B_pad != B:
        xk = jnp.zeros((B_pad, in_dim), act_dtype).at[:B, :].set(xk)

    flat_args = [xk]
    for w, b in params:
        flat_args.append(w.astype(weight_dtype))  # no-op if prepare_params() was used
        flat_args.append(b)

    def resident(arr):
        # Same block every grid step -> stays VMEM-resident across batch tiles.
        return pl.BlockSpec(arr.shape, lambda i: (0, 0))

    in_specs = [pl.BlockSpec((TB, in_dim), lambda i: (i, 0))]
    for w, b in params:
        in_specs.append(resident(w))
        in_specs.append(resident(b))
    out_spec = pl.BlockSpec((TB, out_dim), lambda i: (i, 0))

    dims = [in_dim] + [int(w.shape[1]) for w, _ in params]
    flops = 2 * B_pad * sum(a * c for a, c in zip(dims[:-1], dims[1:]))
    bytes_accessed = (
        B_pad * in_dim * jnp.dtype(act_dtype).itemsize
        + sum(int(w.size) * jnp.dtype(weight_dtype).itemsize + int(b.size) * 4
              for w, b in params)
        + B_pad * out_dim * 4)

    y = pl.pallas_call(
        partial(mlp_kernel, compute_dtype=weight_dtype),
        out_shape=jax.ShapeDtypeStruct((B_pad, out_dim), jnp.float32),
        grid=(B_pad // TB,),
        in_specs=in_specs,
        out_specs=out_spec,
        compiler_params=pltpu.CompilerParams(
            # On v7x, pltpu.CORE_PARALLEL here shards batch tiles across both TCs.
            dimension_semantics=("parallel",),
            vmem_limit_bytes=48 * 1024 * 1024),
        cost_estimate=pl.CostEstimate(
            flops=int(flops), transcendentals=0,
            bytes_accessed=int(bytes_accessed)),
    )(*flat_args)

    return y if B_pad == B else y[:B]


def init_params(key, dims):
    """torch.nn.Linear default init (uniform +-1/sqrt(fan_in)); W stored [in, out]."""
    params = []
    for in_d, out_d in zip(dims[:-1], dims[1:]):
        key, kw, kb = jax.random.split(key, 3)
        bound = 1.0 / math.sqrt(in_d)
        w = jax.random.uniform(kw, (in_d, out_d), jnp.float32, -bound, bound)
        b = jax.random.uniform(kb, (1, out_d), jnp.float32, -bound, bound)
        params.append((w, b))
    return params


def reference_forward(x, params):
    """Pure-JAX reference of the same forward pass."""
    h = x
    for i, (w, b) in enumerate(params):
        h = h @ w + b
        if i < len(params) - 1:
            h = jnp.maximum(h, 0.0)
    return h


if __name__ == "__main__":
    in_dim, out_dim = 168, 9
    dims = (in_dim, 256, 128, 64, 32, out_dim)
    batch = 8

    key = jax.random.PRNGKey(0)
    key_x, key_p = jax.random.split(key)
    x = jax.random.normal(key_x, (batch, in_dim), jnp.float32)
    params = init_params(key_p, dims)

    ref = reference_forward(x, params)

    # f32 MXU path: must match the reference tightly.
    params_f32 = prepare_params(params, jnp.float32)
    out = jax.block_until_ready(mlp_forward(x, params_f32))
    assert out.shape == (batch, out_dim), out.shape
    assert jnp.allclose(out, ref, atol=1e-4, rtol=1e-4), "f32 mismatch vs JAX reference"

    # bf16 MXU path (weights + activations bf16, f32 accumulation): looser tolerance.
    params_bf16 = prepare_params(params, jnp.bfloat16)
    out_bf16 = jax.block_until_ready(
        mlp_forward(x, params_bf16, weight_dtype=jnp.bfloat16))
    assert out_bf16.shape == (batch, out_dim), out_bf16.shape
    assert jnp.allclose(out_bf16, ref, atol=1e-1, rtol=5e-2), "bf16 mismatch vs JAX reference"

    print("KERNEL_OK")
</pallas_src>

<mosaic_0001>
module attributes {stable_mosaic.version = 11 : i64} {
  func.func @mlp_kernel(%arg0: i32, %arg1: memref<8x168xf32, #tpu.memory_space<vmem>>, %arg2: memref<168x256xf32, #tpu.memory_space<vmem>>, %arg3: memref<1x256xf32, #tpu.memory_space<vmem>>, %arg4: memref<256x128xf32, #tpu.memory_space<vmem>>, %arg5: memref<1x128xf32, #tpu.memory_space<vmem>>, %arg6: memref<128x64xf32, #tpu.memory_space<vmem>>, %arg7: memref<1x64xf32, #tpu.memory_space<vmem>>, %arg8: memref<64x32xf32, #tpu.memory_space<vmem>>, %arg9: memref<1x32xf32, #tpu.memory_space<vmem>>, %arg10: memref<32x9xf32, #tpu.memory_space<vmem>>, %arg11: memref<1x9xf32, #tpu.memory_space<vmem>>, %arg12: memref<8x9xf32, #tpu.memory_space<vmem>>) attributes {dimension_semantics = [#tpu.dimension_semantics<parallel>], iteration_bounds = array<i64: 1>, scalar_prefetch = 0 : i64, scratch_operands = 0 : i64, tpu.core_type = #tpu.core_type<tc>, window_params = [{transform_indices = @transform_0, window_bounds = array<i64: 8, 168>}, {pipeline_mode = #tpu.pipeline_mode<synchronous>, transform_indices = @transform_1, window_bounds = array<i64: 168, 256>}, {pipeline_mode = #tpu.pipeline_mode<synchronous>, transform_indices = @transform_2, window_bounds = array<i64: 1, 256>}, {pipeline_mode = #tpu.pipeline_mode<synchronous>, transform_indices = @transform_3, window_bounds = array<i64: 256, 128>}, {pipeline_mode = #tpu.pipeline_mode<synchronous>, transform_indices = @transform_4, window_bounds = array<i64: 1, 128>}, {pipeline_mode = #tpu.pipeline_mode<synchronous>, transform_indices = @transform_5, window_bounds = array<i64: 128, 64>}, {pipeline_mode = #tpu.pipeline_mode<synchronous>, transform_indices = @transform_6, window_bounds = array<i64: 1, 64>}, {pipeline_mode = #tpu.pipeline_mode<synchronous>, transform_indices = @transform_7, window_bounds = array<i64: 64, 32>}, {pipeline_mode = #tpu.pipeline_mode<synchronous>, transform_indices = @transform_8, window_bounds = array<i64: 1, 32>}, {pipeline_mode = #tpu.pipeline_mode<synchronous>, transform_indices = @transform_9, window_bounds = array<i64: 32, 9>}, {pipeline_mode = #tpu.pipeline_mode<synchronous>, transform_indices = @transform_10, window_bounds = array<i64: 1, 9>}, {transform_indices = @transform_11, window_bounds = array<i64: 8, 9>}]} {
    %c0 = arith.constant 0 : index
    %c0_0 = arith.constant 0 : index
    %0 = vector.load %arg1[%c0, %c0_0] : memref<8x168xf32, #tpu.memory_space<vmem>>, vector<8x168xf32>
    %c0_1 = arith.constant 0 : index
    %c0_2 = arith.constant 0 : index
    %1 = vector.load %arg2[%c0_1, %c0_2] : memref<168x256xf32, #tpu.memory_space<vmem>>, vector<168x256xf32>
    %cst = arith.constant dense<0.000000e+00> : vector<8x256xf32>
    %2 = tpu.matmul %0, %1, %cst {dimension_numbers = #tpu.dot_dimension_numbers<[1], [0], [0], [1], [0, 0, 1, 1], [], []>} : vector<8x168xf32>, vector<168x256xf32>, vector<8x256xf32> -> vector<8x256xf32>
    %c0_3 = arith.constant 0 : index
    %c0_4 = arith.constant 0 : index
    %3 = vector.load %arg3[%c0_3, %c0_4] : memref<1x256xf32, #tpu.memory_space<vmem>>, vector<1x256xf32>
    %4 = vector.broadcast %3 : vector<1x256xf32> to vector<8x256xf32>
    %5 = arith.addf %2, %4 : vector<8x256xf32>
    %cst_5 = arith.constant 0.000000e+00 : f32
    %6 = vector.broadcast %cst_5 : f32 to vector<8x256xf32>
    %7 = arith.maximumf %5, %6 : vector<8x256xf32>
    %c0_6 = arith.constant 0 : index
    %c0_7 = arith.constant 0 : index
    %8 = vector.load %arg4[%c0_6, %c0_7] : memref<256x128xf32, #tpu.memory_space<vmem>>, vector<256x128xf32>
    %cst_8 = arith.constant dense<0.000000e+00> : vector<8x128xf32>
    %9 = tpu.matmul %7, %8, %cst_8 {dimension_numbers = #tpu.dot_dimension_numbers<[1], [0], [0], [1], [0, 0, 1, 1], [], []>} : vector<8x256xf32>, vector<256x128xf32>, vector<8x128xf32> -> vector<8x128xf32>
    %c0_9 = arith.constant 0 : index
    %c0_10 = arith.constant 0 : index
    %10 = vector.load %arg5[%c0_9, %c0_10] : memref<1x128xf32, #tpu.memory_space<vmem>>, vector<1x128xf32>
    %11 = vector.broadcast %10 : vector<1x128xf32> to vector<8x128xf32>
    %12 = arith.addf %9, %11 : vector<8x128xf32>
    %cst_11 = arith.constant 0.000000e+00 : f32
    %13 = vector.broadcast %cst_11 : f32 to vector<8x128xf32>
    %14 = arith.maximumf %12, %13 : vector<8x128xf32>
    %c0_12 = arith.constant 0 : index
    %c0_13 = arith.constant 0 : index
    %15 = vector.load %arg6[%c0_12, %c0_13] : memref<128x64xf32, #tpu.memory_space<vmem>>, vector<128x64xf32>
    %cst_14 = arith.constant dense<0.000000e+00> : vector<8x64xf32>
    %16 = tpu.matmul %14, %15, %cst_14 {dimension_numbers = #tpu.dot_dimension_numbers<[1], [0], [0], [1], [0, 0, 1, 1], [], []>} : vector<8x128xf32>, vector<128x64xf32>, vector<8x64xf32> -> vector<8x64xf32>
    %c0_15 = arith.constant 0 : index
    %c0_16 = arith.constant 0 : index
    %17 = vector.load %arg7[%c0_15, %c0_16] : memref<1x64xf32, #tpu.memory_space<vmem>>, vector<1x64xf32>
    %18 = vector.broadcast %17 : vector<1x64xf32> to vector<8x64xf32>
    %19 = arith.addf %16, %18 : vector<8x64xf32>
    %cst_17 = arith.constant 0.000000e+00 : f32
    %20 = vector.broadcast %cst_17 : f32 to vector<8x64xf32>
    %21 = arith.maximumf %19, %20 : vector<8x64xf32>
    %c0_18 = arith.constant 0 : index
    %c0_19 = arith.constant 0 : index
    %22 = vector.load %arg8[%c0_18, %c0_19] : memref<64x32xf32, #tpu.memory_space<vmem>>, vector<64x32xf32>
    %cst_20 = arith.constant dense<0.000000e+00> : vector<8x32xf32>
    %23 = tpu.matmul %21, %22, %cst_20 {dimension_numbers = #tpu.dot_dimension_numbers<[1], [0], [0], [1], [0, 0, 1, 1], [], []>} : vector<8x64xf32>, vector<64x32xf32>, vector<8x32xf32> -> vector<8x32xf32>
    %c0_21 = arith.constant 0 : index
    %c0_22 = arith.constant 0 : index
    %24 = vector.load %arg9[%c0_21, %c0_22] : memref<1x32xf32, #tpu.memory_space<vmem>>, vector<1x32xf32>
    %25 = vector.broadcast %24 : vector<1x32xf32> to vector<8x32xf32>
    %26 = arith.addf %23, %25 : vector<8x32xf32>
    %cst_23 = arith.constant 0.000000e+00 : f32
    %27 = vector.broadcast %cst_23 : f32 to vector<8x32xf32>
    %28 = arith.maximumf %26, %27 : vector<8x32xf32>
    %c0_24 = arith.constant 0 : index
    %c0_25 = arith.constant 0 : index
    %29 = vector.load %arg10[%c0_24, %c0_25] : memref<32x9xf32, #tpu.memory_space<vmem>>, vector<32x9xf32>
    %cst_26 = arith.constant dense<0.000000e+00> : vector<8x9xf32>
    %30 = tpu.matmul %28, %29, %cst_26 {dimension_numbers = #tpu.dot_dimension_numbers<[1], [0], [0], [1], [0, 0, 1, 1], [], []>} : vector<8x32xf32>, vector<32x9xf32>, vector<8x9xf32> -> vector<8x9xf32>
    %c0_27 = arith.constant 0 : index
    %c0_28 = arith.constant 0 : index
    %31 = vector.load %arg11[%c0_27, %c0_28] : memref<1x9xf32, #tpu.memory_space<vmem>>, vector<1x9xf32>
    %32 = vector.broadcast %31 : vector<1x9xf32> to vector<8x9xf32>
    %33 = arith.addf %30, %32 : vector<8x9xf32>
    %c0_29 = arith.constant 0 : index
    %c0_30 = arith.constant 0 : index
    %34 = vector.load %arg12[%c0_29, %c0_30] : memref<8x9xf32, #tpu.memory_space<vmem>>, vector<8x9xf32>
    tpu.vector_store %arg12[%c0_29, %c0_30], %33 {strides = array<i32>} : memref<8x9xf32, #tpu.memory_space<vmem>>, vector<8x9xf32>,
    return
  }
  func.func @transform_0(%arg0: i32) -> (i32, i32) {
    %c0_i32 = arith.constant 0 : i32
    %c0_i32_0 = arith.constant 0 : i32
    return %arg0, %c0_i32 : i32, i32
  }
  func.func @transform_1(%arg0: i32) -> (i32, i32) {
    %c0_i32 = arith.constant 0 : i32
    %c0_i32_0 = arith.constant 0 : i32
    %c0_i32_1 = arith.constant 0 : i32
    return %c0_i32, %c0_i32_0 : i32, i32
  }
  func.func @transform_2(%arg0: i32) -> (i32, i32) {
    %c0_i32 = arith.constant 0 : i32
    %c0_i32_0 = arith.constant 0 : i32
    %c0_i32_1 = arith.constant 0 : i32
    return %c0_i32, %c0_i32_0 : i32, i32
  }
  func.func @transform_3(%arg0: i32) -> (i32, i32) {
    %c0_i32 = arith.constant 0 : i32
    %c0_i32_0 = arith.constant 0 : i32
    %c0_i32_1 = arith.constant 0 : i32
    return %c0_i32, %c0_i32_0 : i32, i32
  }
  func.func @transform_4(%arg0: i32) -> (i32, i32) {
    %c0_i32 = arith.constant 0 : i32
    %c0_i32_0 = arith.constant 0 : i32
    %c0_i32_1 = arith.constant 0 : i32
    return %c0_i32, %c0_i32_0 : i32, i32
  }
  func.func @transform_5(%arg0: i32) -> (i32, i32) {
    %c0_i32 = arith.constant 0 : i32
    %c0_i32_0 = arith.constant 0 : i32
    %c0_i32_1 = arith.constant 0 : i32
    return %c0_i32, %c0_i32_0 : i32, i32
  }
  func.func @transform_6(%arg0: i32) -> (i32, i32) {
    %c0_i32 = arith.constant 0 : i32
    %c0_i32_0 = arith.constant 0 : i32
    %c0_i32_1 = arith.constant 0 : i32
    return %c0_i32, %c0_i32_0 : i32, i32
  }
  func.func @transform_7(%arg0: i32) -> (i32, i32) {
    %c0_i32 = arith.constant 0 : i32
    %c0_i32_0 = arith.constant 0 : i32
    %c0_i32_1 = arith.constant 0 : i32
    return %c0_i32, %c0_i32_0 : i32, i32
  }
  func.func @transform_8(%arg0: i32) -> (i32, i32) {
    %c0_i32 = arith.constant 0 : i32
    %c0_i32_0 = arith.constant 0 : i32
    %c0_i32_1 = arith.constant 0 : i32
    return %c0_i32, %c0_i32_0 : i32, i32
  }
  func.func @transform_9(%arg0: i32) -> (i32, i32) {
    %c0_i32 = arith.constant 0 : i32
    %c0_i32_0 = arith.constant 0 : i32
    %c0_i32_1 = arith.constant 0 : i32
    return %c0_i32, %c0_i32_0 : i32, i32
  }
  func.func @transform_10(%arg0: i32) -> (i32, i32) {
    %c0_i32 = arith.constant 0 : i32
    %c0_i32_0 = arith.constant 0 : i32
    %c0_i32_1 = arith.constant 0 : i32
    return %c0_i32, %c0_i32_0 : i32, i32
  }
  func.func @transform_11(%arg0: i32) -> (i32, i32) {
    %c0_i32 = arith.constant 0 : i32
    %c0_i32_0 = arith.constant 0 : i32
    return %arg0, %c0_i32 : i32, i32
  }
}

</mosaic_0001>

<llo_original>
// kernel: mlp_forward.1
$region0: #{mlp_forward.1}
  #allocation0 [shape = 'u32[]', space=smem, size = 0x4, offset = 0x4, fixed_abs, tag = 'smem constant byte address 0x4 - core index']
  #allocation1 [shape = 'u32[72,128]{1,0:T(1,128)}', space=vmem, size = 0x9000, scoped, tag = 'internal scratch']
  %s0 = inlined_call_operand.hbm [shape: f32[8,168], index: 0, kind: input, shape index: {}]
  %s1 = inlined_call_operand.vmem [shape: f32[168,256], index: 1, kind: input, shape index: {}]
  %s2 = inlined_call_operand.hbm [shape: f32[1,256], index: 2, kind: input, shape index: {}]
  %s3 = inlined_call_operand.hbm [shape: f32[256,128], index: 3, kind: input, shape index: {}]
  %s4 = inlined_call_operand.vmem [shape: f32[1,128], index: 4, kind: input, shape index: {}]
  %s5 = inlined_call_operand.vmem [shape: f32[128,64], index: 5, kind: input, shape index: {}]
  %s6 = inlined_call_operand.vmem [shape: f32[1,64], index: 6, kind: input, shape index: {}]
  %s7 = inlined_call_operand.vmem [shape: f32[64,32], index: 7, kind: input, shape index: {}]
  %s8 = inlined_call_operand.vmem [shape: f32[1,32], index: 8, kind: input, shape index: {}]
  %s9 = inlined_call_operand.vmem [shape: f32[32,9], index: 9, kind: input, shape index: {}]
  %s10 = inlined_call_operand.vmem [shape: f32[1,9], index: 10, kind: input, shape index: {}]
  %s11 = inlined_call_operand.hbm [shape: f32[8,9], index: 11, kind: output, shape index: {}]
  %s12 = sld [smem:[#allocation0]]
  $region66: #{mlp_forward.1} parent=0
    _
  %s14 = ssub.s32 1, %s12
  %s15 = scalar_select 0, %s14, %s12
  $region1: #{mlp_forward.1} parent=0
    #allocation2 [shape = 'u8[8192]{0}', space=vmem, size = 0x2000, scoped, tag = 'input window, operand 0, single buffered']
    #allocation3 [shape = 's32[1]{0}', space=sflag, size = 0x4, scoped, tag = 'scoped memory for mlp_forward.1']
    #allocation4 [shape = 's32[1]{0}', space=sflag, size = 0x4, scoped, tag = 'scoped memory for mlp_forward.1']
    #allocation5 [shape = 'u8[1024]{0}', space=vmem, size = 0x400, scoped, tag = 'input window, operand 2, single buffered']
    #allocation6 [shape = 's32[1]{0}', space=sflag, size = 0x4, scoped, tag = 'scoped memory for mlp_forward.1']
    #allocation7 [shape = 'u8[131072]{0}', space=vmem, size = 0x20000, scoped, tag = 'input window, operand 3, single buffered']
    #allocation8 [shape = 'u8[4096]{0}', space=vmem, size = 0x1000, scoped, tag = 'output window, operand 0, single buffered']
    %16 = vsyncpa [#allocation3], 0
    %17 = vsyncpa [#allocation6], 0
    %18 = vsyncpa [#allocation4], 0
    // Predicated region
    $region2: #{mlp_forward.1} parent=1 // pred_check
      _
    $region3: #{mlp_forward.1} parent=1 // pred_check_branch
      %20 = sbr.rel (0) target = $region5
    $region4: #{mlp_forward.1} parent=1 // pred_region
      %22 = vsyncadd [#allocation3], 0
      %s24 = sshll.u32 %s0, 4
      %s25 = int_to_ptr.hbm [resolvable:$true] %s24
      %s26 = sshll.u32 [#allocation2], 4
      %s27 = int_to_ptr.vmem [resolvable:$true] %s26
      %29 = dma.hbm_to_vmem [thread:$0]  %s25, 256, %s27, [#allocation3]
    $region5: #{mlp_forward.1} parent=1 // pred_fallthru
      _
    // Predicated region
    $region6: #{mlp_forward.1} parent=1 // pred_check
      _
    $region7: #{mlp_forward.1} parent=1 // pred_check_branch
      %31 = sbr.rel (0) target = $region9
    $region8: #{mlp_forward.1} parent=1 // pred_region
      _
    $region9: #{mlp_forward.1} parent=1 // pred_fallthru
      _
    // Predicated region
    $region10: #{mlp_forward.1} parent=1 // pred_check
      _
    $region11: #{mlp_forward.1} parent=1 // pred_check_branch
      %33 = sbr.rel (0) target = $region13
    $region12: #{mlp_forward.1} parent=1 // pred_region
      %35 = vsyncadd [#allocation6], 0
      %s37 = sshll.u32 %s2, 4
      %s38 = int_to_ptr.hbm [resolvable:$true] %s37
      %s39 = sshll.u32 [#allocation5], 4
      %s40 = int_to_ptr.vmem [resolvable:$true] %s39
      %42 = dma.hbm_to_vmem [thread:$0]  %s38, 32, %s40, [#allocation6]
    $region13: #{mlp_forward.1} parent=1 // pred_fallthru
      _
    // Predicated region
    $region14: #{mlp_forward.1} parent=1 // pred_check
      _
    $region15: #{mlp_forward.1} parent=1 // pred_check_branch
      %44 = sbr.rel (0) target = $region17
    $region16: #{mlp_forward.1} parent=1 // pred_region
      %46 = vsyncadd [#allocation6], 0
      %s47 = sshll.u32 %s3, 4
      %s48 = int_to_ptr.hbm [resolvable:$true] %s47
      %s49 = sshll.u32 [#allocation7], 4
      %s50 = int_to_ptr.vmem [resolvable:$true] %s49
      %55 = dma.hbm_to_vmem [thread:$0]  %s48, 4096, %s50, [#allocation6], 128, 128, 8
    $region17: #{mlp_forward.1} parent=1 // pred_fallthru
      _
    // Predicated region
    $region18: #{mlp_forward.1} parent=1 // pred_check
      _
    $region19: #{mlp_forward.1} parent=1 // pred_check_branch
      %57 = sbr.rel (0) target = $region21
    $region20: #{mlp_forward.1} parent=1 // pred_region
      _
    $region21: #{mlp_forward.1} parent=1 // pred_fallthru
      _
    // Predicated region
    $region22: #{mlp_forward.1} parent=1 // pred_check
      _
    $region23: #{mlp_forward.1} parent=1 // pred_check_branch
      %59 = sbr.rel (0) target = $region25
    $region24: #{mlp_forward.1} parent=1 // pred_region
      _
    $region25: #{mlp_forward.1} parent=1 // pred_fallthru
      _
    // Predicated region
    $region26: #{mlp_forward.1} parent=1 // pred_check
      _
    $region27: #{mlp_forward.1} parent=1 // pred_check_branch
      %61 = sbr.rel (0) target = $region29
    $region28: #{mlp_forward.1} parent=1 // pred_region
      _
    $region29: #{mlp_forward.1} parent=1 // pred_fallthru
      _
    // Predicated region
    $region30: #{mlp_forward.1} parent=1 // pred_check
      _
    $region31: #{mlp_forward.1} parent=1 // pred_check_branch
      %63 = sbr.rel (0) target = $region33
    $region32: #{mlp_forward.1} parent=1 // pred_region
      _
    $region33: #{mlp_forward.1} parent=1 // pred_fallthru
      _
    // Predicated region
    $region34: #{mlp_forward.1} parent=1 // pred_check
      _
    $region35: #{mlp_forward.1} parent=1 // pred_check_branch
      %65 = sbr.rel (0) target = $region37
    $region36: #{mlp_forward.1} parent=1 // pred_region
      _
    $region37: #{mlp_forward.1} parent=1 // pred_fallthru
      _
    // Predicated region
    $region38: #{mlp_forward.1} parent=1 // pred_check
      _
    $region39: #{mlp_forward.1} parent=1 // pred_check_branch
      %67 = sbr.rel (0) target = $region41
    $region40: #{mlp_forward.1} parent=1 // pred_region
      _
    $region41: #{mlp_forward.1} parent=1 // pred_fallthru
      _
    // Predicated region
    $region42: #{mlp_forward.1} parent=1 // pred_check
      _
    $region43: #{mlp_forward.1} parent=1 // pred_check_branch
      %69 = sbr.rel (0) target = $region45
    $region44: #{mlp_forward.1} parent=1 // pred_region
      _
    $region45: #{mlp_forward.1} parent=1 // pred_fallthru
      _
    // Predicated region
    $region46: #{mlp_forward.1} parent=1 // pred_check
      _
    $region47: #{mlp_forward.1} parent=1 // pred_check_branch
      %71 = sbr.rel (0) target = $region49
    $region48: #{mlp_forward.1} parent=1 // pred_region
      %73 = dma.done [#allocation3], 256
    $region49: #{mlp_forward.1} parent=1 // pred_fallthru
      _
    // Predicated region
    $region50: #{mlp_forward.1} parent=1 // pred_check
      _
    $region51: #{mlp_forward.1} parent=1 // pred_check_branch
      %75 = sbr.rel (0) target = $region53
    $region52: #{mlp_forward.1} parent=1 // pred_region
      %77 = dma.done [#allocation6], 32
    $region53: #{mlp_forward.1} parent=1 // pred_fallthru
      _
    // Predicated region
    $region54: #{mlp_forward.1} parent=1 // pred_check
      _
    $region55: #{mlp_forward.1} parent=1 // pred_check_branch
      %79 = sbr.rel (0) target = $region57
    $region56: #{mlp_forward.1} parent=1 // pred_region
      %81 = dma.done [#allocation6], 4096
    $region57: #{mlp_forward.1} parent=1 // pred_fallthru
      _
    %v82 = vld [vmem:[#allocation2] sm:$0xff]
    %v83 = vld [vmem:[#allocation2 + $0x8] sm:$0xff]
    %v84 = vld [vmem:[%s1] sm:$0xff]
    %v85 = vld [vmem:[%s1 + $0x8] sm:$0xff]
    %v86 = vld [vmem:[%s1 + $0x10] sm:$0xff]
    %v87 = vld [vmem:[%s1 + $0x18] sm:$0xff]
    %v88 = vld [vmem:[%s1 + $0x20] sm:$0xff]
    %v89 = vld [vmem:[%s1 + $0x28] sm:$0xff]
    %v90 = vld [vmem:[%s1 + $0x30] sm:$0xff]
    %v91 = vld [vmem:[%s1 + $0x38] sm:$0xff]
    %v92 = vld [vmem:[%s1 + $0x40] sm:$0xff]
    %v93 = vld [vmem:[%s1 + $0x48] sm:$0xff]
    %v94 = vld [vmem:[%s1 + $0x50] sm:$0xff]
    %v95 = vld [vmem:[%s1 + $0x58] sm:$0xff]
    %v96 = vld [vmem:[%s1 + $0x60] sm:$0xff]
    %v97 = vld [vmem:[%s1 + $0x68] sm:$0xff]
    %v98 = vld [vmem:[%s1 + $0x70] sm:$0xff]
    %v99 = vld [vmem:[%s1 + $0x78] sm:$0xff]
    %v100 = vld [vmem:[%s1 + $0x80] sm:$0xff]
    %v101 = vld [vmem:[%s1 + $0x88] sm:$0xff]
    %v102 = vld [vmem:[%s1 + $0x90] sm:$0xff]
    %v103 = vld [vmem:[%s1 + $0x98] sm:$0xff]
    %v104 = vld [vmem:[%s1 + $0xa0] sm:$0xff]
    %v105 = vld [vmem:[%s1 + $0xa8] sm:$0xff]
    %v106 = vld [vmem:[%s1 + $0xb0] sm:$0xff]
    %v107 = vld [vmem:[%s1 + $0xb8] sm:$0xff]
    %v108 = vld [vmem:[%s1 + $0xc0] sm:$0xff]
    %v109 = vld [vmem:[%s1 + $0xc8] sm:$0xff]
    %v110 = vld [vmem:[%s1 + $0xd0] sm:$0xff]
    %v111 = vld [vmem:[%s1 + $0xd8] sm:$0xff]
    %v112 = vld [vmem:[%s1 + $0xe0] sm:$0xff]
    %v113 = vld [vmem:[%s1 + $0xe8] sm:$0xff]
    %v114 = vld [vmem:[%s1 + $0xf0] sm:$0xff]
    %v115 = vld [vmem:[%s1 + $0xf8] sm:$0xff]
    %v116 = vld [vmem:[%s1 + $0x100] sm:$0xff]
    %v117 = vld [vmem:[%s1 + $0x108] sm:$0xff]
    %v118 = vld [vmem:[%s1 + $0x110] sm:$0xff]
    %v119 = vld [vmem:[%s1 + $0x118] sm:$0xff]
    %v120 = vld [vmem:[%s1 + $0x120] sm:$0xff]
    %v121 = vld [vmem:[%s1 + $0x128] sm:$0xff]
    %v122 = vld [vmem:[%s1 + $0x130] sm:$0xff]
    %v123 = vld [vmem:[%s1 + $0x138] sm:$0xff]
    %v124 = vld [vmem:[%s1 + $0x140] sm:$0xff]
    %v125 = vld [vmem:[%s1 + $0x148] sm:$0xff]
    %v126 = vld [vmem:[#allocation5] sm:$0x3]
    %v128 = vperm.slane %v126, 0
    %v129 = vperm.slane %v126, 1
    %vm132 = vcmask 326656
    %v134 = vsel %vm132, %v83, 0
    %136 = vmatpush.msra.mxu0 %v114
    %137 = vmatpush.msra.mxu0 %v112
    %138 = vmatpush.msra.mxu0 %v110
    %139 = vmatpush.msra.mxu0 %v108
    %140 = vmatpush.msra.mxu0 %v106
    %141 = vmatpush.msra.mxu0 %v104
    %142 = vmatpush.msra.mxu0 %v102
    %143 = vmatpush.msra.mxu0 %v100
    %144 = vmatpush.msra.mxu0 %v98
    %145 = vmatpush.msra.mxu0 %v96
    %146 = vmatpush.msra.mxu0 %v94
    %147 = vmatpush.msra.mxu0 %v92
    %148 = vmatpush.msra.mxu0 %v90
    %149 = vmatpush.msra.mxu0 %v88
    %150 = vmatpush.msra.mxu0 %v86
    %151 = vmatpush.msra.mxu0 %v84
    %152 = vmatmul.f32.gmra.mxu0 %v82
    %v153 = vpop.f32.mrf.mxu0
    %v154 = vadd.f32 %v128, %v153
    %155 = vdwg.mxu0
    %156 = vmatpush.msra.mxu0 0.0
    %157 = vmatpush.msra.mxu0 0.0
    %158 = vmatpush.msra.mxu0 0.0
    %159 = vmatpush.msra.mxu0 0.0
    %160 = vmatpush.msra.mxu0 0.0
    %161 = vmatpush.msra.mxu0 0.0
    %162 = vmatpush.msra.mxu0 0.0
    %163 = vmatpush.msra.mxu0 0.0
    %164 = vmatpush.msra.mxu0 0.0
    %165 = vmatpush.msra.mxu0 0.0
    %166 = vmatpush.msra.mxu0 0.0
    %167 = vmatpush.msra.mxu0 %v124
    %168 = vmatpush.msra.mxu0 %v122
    %169 = vmatpush.msra.mxu0 %v120
    %170 = vmatpush.msra.mxu0 %v118
    %171 = vmatpush.msra.mxu0 %v116
    %172 = vmatmul.f32.gmra.mxu0 %v134
    %v173 = vpop.f32.mrf.mxu0
    %v174 = vadd.f32 %v154, %v173
    %175 = vdwg.mxu0
    %176 = vmatpush.msra.mxu0 %v115
    %177 = vmatpush.msra.mxu0 %v113
    %178 = vmatpush.msra.mxu0 %v111
    %179 = vmatpush.msra.mxu0 %v109
    %180 = vmatpush.msra.mxu0 %v107
    %181 = vmatpush.msra.mxu0 %v105
    %182 = vmatpush.msra.mxu0 %v103
    %183 = vmatpush.msra.mxu0 %v101
    %184 = vmatpush.msra.mxu0 %v99
    %185 = vmatpush.msra.mxu0 %v97
    %186 = vmatpush.msra.mxu0 %v95
    %187 = vmatpush.msra.mxu0 %v93
    %188 = vmatpush.msra.mxu0 %v91
    %189 = vmatpush.msra.mxu0 %v89
    %190 = vmatpush.msra.mxu0 %v87
    %191 = vmatpush.msra.mxu0 %v85
    %192 = vmatmul.f32.gmra.mxu0 %v82
    %v193 = vpop.f32.mrf.mxu0
    %v194 = vadd.f32 %v129, %v193
    %195 = vdwg.mxu0
    %196 = vmatpush.msra.mxu0 0.0
    %197 = vmatpush.msra.mxu0 0.0
    %198 = vmatpush.msra.mxu0 0.0
    %199 = vmatpush.msra.mxu0 0.0
    %200 = vmatpush.msra.mxu0 0.0
    %201 = vmatpush.msra.mxu0 0.0
    %202 = vmatpush.msra.mxu0 0.0
    %203 = vmatpush.msra.mxu0 0.0
    %204 = vmatpush.msra.mxu0 0.0
    %205 = vmatpush.msra.mxu0 0.0
    %206 = vmatpush.msra.mxu0 0.0
    %207 = vmatpush.msra.mxu0 %v125
    %208 = vmatpush.msra.mxu0 %v123
    %209 = vmatpush.msra.mxu0 %v121
    %210 = vmatpush.msra.mxu0 %v119
    %211 = vmatpush.msra.mxu0 %v117
    %212 = vmatmul.f32.gmra.mxu0 %v134
    %v213 = vpop.f32.mrf.mxu0
    %v214 = vadd.f32 %v194, %v213
    %215 = vdwg.mxu0
    %v216 = vmax.f32 %v174, 0.0
    %v217 = vmax.f32 %v214, 0.0
    %v218 = vld [vmem:[#allocation7] sm:$0xff]
    %v219 = vld [vmem:[#allocation7 + $0x8] sm:$0xff]
    %v220 = vld [vmem:[#allocation7 + $0x10] sm:$0xff]
    %v221 = vld [vmem:[#allocation7 + $0x18] sm:$0xff]
    %v222 = vld [vmem:[#allocation7 + $0x20] sm:$0xff]
    %v223 = vld [vmem:[#allocation7 + $0x28] sm:$0xff]
    %v224 = vld [vmem:[#allocation7 + $0x30] sm:$0xff]
    %v225 = vld [vmem:[#allocation7 + $0x38] sm:$0xff]
    %v226 = vld [vmem:[#allocation7 + $0x40] sm:$0xff]
    %v227 = vld [vmem:[#allocation7 + $0x48] sm:$0xff]
    %v228 = vld [vmem:[#allocation7 + $0x50] sm:$0xff]
    %v229 = vld [vmem:[#allocation7 + $0x58] sm:$0xff]
    %v230 = vld [vmem:[#allocation7 + $0x60] sm:$0xff]
    %v231 = vld [vmem:[#allocation7 + $0x68] sm:$0xff]
    %v232 = vld [vmem:[#allocation7 + $0x70] sm:$0xff]
    %v233 = vld [vmem:[#allocation7 + $0x78] sm:$0xff]
    %v234 = vld [vmem:[#allocation7 + $0x80] sm:$0xff]
    %v235 = vld [vmem:[#allocation7 + $0x88] sm:$0xff]
    %v236 = vld [vmem:[#allocation7 + $0x90] sm:$0xff]
    %v237 = vld [vmem:[#allocation7 + $0x98] sm:$0xff]
    %v238 = vld [vmem:[#allocation7 + $0xa0] sm:$0xff]
    %v239 = vld [vmem:[#allocation7 + $0xa8] sm:$0xff]
    %v240 = vld [vmem:[#allocation7 + $0xb0] sm:$0xff]
    %v241 = vld [vmem:[#allocation7 + $0xb8] sm:$0xff]
    %v242 = vld [vmem:[#allocation7 + $0xc0] sm:$0xff]
    %v243 = vld [vmem:[#allocation7 + $0xc8] sm:$0xff]
    %v244 = vld [vmem:[#allocation7 + $0xd0] sm:$0xff]
    %v245 = vld [vmem:[#allocation7 + $0xd8] sm:$0xff]
    %v246 = vld [vmem:[#allocation7 + $0xe0] sm:$0xff]
    %v247 = vld [vmem:[#allocation7 + $0xe8] sm:$0xff]
    %v248 = vld [vmem:[#allocation7 + $0xf0] sm:$0xff]
    %v249 = vld [vmem:[#allocation7 + $0xf8] sm:$0xff]
    %v250 = vld [vmem:[%s4] sm:$0x1]
    %v252 = vperm.slane %v250, 0
    %254 = vmatpush.msra.mxu0 %v233
    %255 = vmatpush.msra.mxu0 %v232
    %256 = vmatpush.msra.mxu0 %v231
    %257 = vmatpush.msra.mxu0 %v230
    %258 = vmatpush.msra.mxu0 %v229
    %259 = vmatpush.msra.mxu0 %v228
    %260 = vmatpush.msra.mxu0 %v227
    %261 = vmatpush.msra.mxu0 %v226
    %262 = vmatpush.msra.mxu0 %v225
    %263 = vmatpush.msra.mxu0 %v224
    %264 = vmatpush.msra.mxu0 %v223
    %265 = vmatpush.msra.mxu0 %v222
    %266 = vmatpush.msra.mxu0 %v221
    %267 = vmatpush.msra.mxu0 %v220
    %268 = vmatpush.msra.mxu0 %v219
    %269 = vmatpush.msra.mxu0 %v218
    %270 = vmatmul.f32.gmra.mxu0 %v216
    %v271 = vpop.f32.mrf.mxu0
    %v272 = vadd.f32 %v252, %v271
    %273 = vdwg.mxu0
    %274 = vmatpush.msra.mxu0 %v249
    %275 = vmatpush.msra.mxu0 %v248
    %276 = vmatpush.msra.mxu0 %v247
    %277 = vmatpush.msra.mxu0 %v246
    %278 = vmatpush.msra.mxu0 %v245
    %279 = vmatpush.msra.mxu0 %v244
    %280 = vmatpush.msra.mxu0 %v243
    %281 = vmatpush.msra.mxu0 %v242
    %282 = vmatpush.msra.mxu0 %v241
    %283 = vmatpush.msra.mxu0 %v240
    %284 = vmatpush.msra.mxu0 %v239
    %285 = vmatpush.msra.mxu0 %v238
    %286 = vmatpush.msra.mxu0 %v237
    %287 = vmatpush.msra.mxu0 %v236
    %288 = vmatpush.msra.mxu0 %v235
    %289 = vmatpush.msra.mxu0 %v234
    %290 = vmatmul.f32.gmra.mxu0 %v217
    %v291 = vpop.f32.mrf.mxu0
    %v292 = vadd.f32 %v272, %v291
    %293 = vdwg.mxu0
    %v294 = vmax.f32 %v292, 0.0
    %v295 = vld [vmem:[%s5] sm:$0xff]
    %v296 = vld [vmem:[%s5 + $0x8] sm:$0xff]
    %v297 = vld [vmem:[%s5 + $0x10] sm:$0xff]
    %v298 = vld [vmem:[%s5 + $0x18] sm:$0xff]
    %v299 = vld [vmem:[%s5 + $0x20] sm:$0xff]
    %v300 = vld [vmem:[%s5 + $0x28] sm:$0xff]
    %v301 = vld [vmem:[%s5 + $0x30] sm:$0xff]
    %v302 = vld [vmem:[%s5 + $0x38] sm:$0xff]
    %v303 = vld [vmem:[%s5 + $0x40] sm:$0xff]
    %v304 = vld [vmem:[%s5 + $0x48] sm:$0xff]
    %v305 = vld [vmem:[%s5 + $0x50] sm:$0xff]
    %v306 = vld [vmem:[%s5 + $0x58] sm:$0xff]
    %v307 = vld [vmem:[%s5 + $0x60] sm:$0xff]
    %v308 = vld [vmem:[%s5 + $0x68] sm:$0xff]
    %v309 = vld [vmem:[%s5 + $0x70] sm:$0xff]
    %v310 = vld [vmem:[%s5 + $0x78] sm:$0xff]
    %v311 = vld [vmem:[%s6] sm:$0x1]
    %v313 = vperm.slane %v311, 0
    %315 = vmatpush.msra.mxu0 %v310
    %316 = vmatpush.msra.mxu0 %v309
    %317 = vmatpush.msra.mxu0 %v308
    %318 = vmatpush.msra.mxu0 %v307
    %319 = vmatpush.msra.mxu0 %v306
    %320 = vmatpush.msra.mxu0 %v305
    %321 = vmatpush.msra.mxu0 %v304
    %322 = vmatpush.msra.mxu0 %v303
    %323 = vmatpush.msra.mxu0 %v302
    %324 = vmatpush.msra.mxu0 %v301
    %325 = vmatpush.msra.mxu0 %v300
    %326 = vmatpush.msra.mxu0 %v299
    %327 = vmatpush.msra.mxu0 %v298
    %328 = vmatpush.msra.mxu0 %v297
    %329 = vmatpush.msra.mxu0 %v296
    %330 = vmatpush.msra.mxu0 %v295
    %331 = vmatmul.f32.gmra.mxu0 %v294
    %v332 = vpop.f32.mrf.mxu0
    %v333 = vadd.f32 %v313, %v332
    %334 = vdwg.mxu0
    %v335 = vmax.f32 %v333, 0.0
    %v336 = vld [vmem:[%s7] sm:$0xff]
    %v337 = vld [vmem:[%s7 + $0x8] sm:$0xff]
    %v338 = vld [vmem:[%s7 + $0x10] sm:$0xff]
    %v339 = vld [vmem:[%s7 + $0x18] sm:$0xff]
    %v340 = vld [vmem:[%s7 + $0x20] sm:$0xff]
    %v341 = vld [vmem:[%s7 + $0x28] sm:$0xff]
    %v342 = vld [vmem:[%s7 + $0x30] sm:$0xff]
    %v343 = vld [vmem:[%s7 + $0x38] sm:$0xff]
    %v344 = vld [vmem:[%s8] sm:$0x1]
    %v346 = vperm.slane %v344, 0
    %vm348 = vcmask 523264
    %v350 = vsel %vm348, %v335, 0
    %352 = vmatpush.msra.mxu0 0.0
    %353 = vmatpush.msra.mxu0 0.0
    %354 = vmatpush.msra.mxu0 0.0
    %355 = vmatpush.msra.mxu0 0.0
    %356 = vmatpush.msra.mxu0 0.0
    %357 = vmatpush.msra.mxu0 0.0
    %358 = vmatpush.msra.mxu0 0.0
    %359 = vmatpush.msra.mxu0 0.0
    %360 = vmatpush.msra.mxu0 %v343
    %361 = vmatpush.msra.mxu0 %v342
    %362 = vmatpush.msra.mxu0 %v341
    %363 = vmatpush.msra.mxu0 %v340
    %364 = vmatpush.msra.mxu0 %v339
    %365 = vmatpush.msra.mxu0 %v338
    %366 = vmatpush.msra.mxu0 %v337
    %367 = vmatpush.msra.mxu0 %v336
    %368 = vmatmul.f32.gmra.mxu0 %v350
    %v369 = vpop.f32.mrf.mxu0
    %v370 = vadd.f32 %v346, %v369
    %371 = vdwg.mxu0
    %v372 = vmax.f32 %v370, 0.0
    %v373 = vld [vmem:[%s9] sm:$0xff]
    %v374 = vld [vmem:[%s9 + $0x8] sm:$0xff]
    %v375 = vld [vmem:[%s9 + $0x10] sm:$0xff]
    %v376 = vld [vmem:[%s9 + $0x18] sm:$0xff]
    %v377 = vld [vmem:[%s10] sm:$0x1]
    %v379 = vperm.slane %v377, 0
    %vm381 = vcmask 261120
    %v383 = vsel %vm381, %v372, 0
    %385 = vmatpush.msra.mxu0 0.0
    %386 = vmatpush.msra.mxu0 0.0
    %387 = vmatpush.msra.mxu0 0.0
    %388 = vmatpush.msra.mxu0 0.0
    %389 = vmatpush.msra.mxu0 0.0
    %390 = vmatpush.msra.mxu0 0.0
    %391 = vmatpush.msra.mxu0 0.0
    %392 = vmatpush.msra.mxu0 0.0
    %393 = vmatpush.msra.mxu0 0.0
    %394 = vmatpush.msra.mxu0 0.0
    %395 = vmatpush.msra.mxu0 0.0
    %396 = vmatpush.msra.mxu0 0.0
    %397 = vmatpush.msra.mxu0 %v376
    %398 = vmatpush.msra.mxu0 %v375
    %399 = vmatpush.msra.mxu0 %v374
    %400 = vmatpush.msra.mxu0 %v373
    %401 = vmatmul.f32.gmra.mxu0 %v383
    %v402 = vpop.f32.mrf.mxu0
    %v403 = vadd.f32 %v379, %v402
    %404 = vdwg.mxu0
    %vm405 = vcmask 72704
    %406 = vst.msk [vmem:[#allocation8] sm:$0xff] %vm405, %v403
    // Predicated region
    $region58: #{mlp_forward.1} parent=1 // pred_check
      _
    $region59: #{mlp_forward.1} parent=1 // pred_check_branch
      %408 = sbr.rel (0) target = $region61
    $region60: #{mlp_forward.1} parent=1 // pred_region
      %410 = vsyncadd [#allocation4], 0
      %s412 = sshll.u32 [#allocation8], 4
      %s413 = int_to_ptr.vmem [resolvable:$true] %s412
      %s414 = sshll.u32 %s11, 4
      %s415 = int_to_ptr.hbm [resolvable:$true] %s414
      %417 = dma.vmem_to_hbm [thread:$0]  %s413, 128, %s415, [#allocation4]
    $region61: #{mlp_forward.1} parent=1 // pred_fallthru
      _
    // Predicated region
    $region62: #{mlp_forward.1} parent=1 // pred_check
      _
    $region63: #{mlp_forward.1} parent=1 // pred_check_branch
      %419 = sbr.rel (0) target = $region65
    $region64: #{mlp_forward.1} parent=1 // pred_region
      %421 = dma.done [#allocation4], 128
    $region65: #{mlp_forward.1} parent=1 // pred_fallthru
      _
    %422 = vsyncpa [#allocation3], 1
    %423 = vsyncpa [#allocation6], 1
    %424 = vsyncpa [#allocation4], 1

</llo_original>
